<compile_context>
chip_gen: v7x
topology: tpu7x:2x2x1
jax: 0.10.0
libtpu: 0.0.40
codegen_flags: <defaults>
</compile_context>

<pallas_src>
import functools

import jax
import jax.numpy as jnp
from jax.experimental import pallas as pl
from jax.experimental.pallas import tpu as pltpu


def _round_up(x, m):
    return ((x + m - 1) // m) * m


def _mlp_kernel(x_ref, w1_ref, b1_ref, w2_ref, b2_ref, w3_ref, b3_ref, o_ref):
    # All operands for this batch tile are resident in VMEM. Biases stay f32;
    # matmuls accumulate in f32 regardless of the input/weight dtype.
    h1 = jnp.dot(x_ref[...], w1_ref[...], preferred_element_type=jnp.float32)
    h1 = jnp.maximum(h1 + b1_ref[...], 0.0)

    h2 = jnp.dot(h1.astype(w2_ref.dtype), w2_ref[...],
                 preferred_element_type=jnp.float32)
    h2 = jnp.maximum(h2 + b2_ref[...], 0.0)

    out = jnp.dot(h2.astype(w3_ref.dtype), w3_ref[...],
                  preferred_element_type=jnp.float32) + b3_ref[...]
    o_ref[...] = out.astype(o_ref.dtype)


@functools.partial(jax.jit, static_argnames=("batch_tile", "compute_dtype"))
def description_feed_forward(x, params, batch_tile=512, compute_dtype=None):
    """x: [B, vector_size]. params: dict of transposed weights + biases.

    compute_dtype: optionally jnp.bfloat16 to run the matmuls with bf16
    inputs/weights (f32 accumulation) on v6e/v7x. Default keeps f32.
    """
    w1, b1 = params["w1"], params["b1"]   # (V, 128),   (1, 128)
    w2, b2 = params["w2"], params["b2"]   # (128, 256), (1, 256)
    w3, b3 = params["w3"], params["b3"]   # (256, D),   (1, D)

    B, V = x.shape
    D_out = w3.shape[1]

    if compute_dtype is not None:
        x = x.astype(compute_dtype)
        w1 = w1.astype(compute_dtype)
        w2 = w2.astype(compute_dtype)
        w3 = w3.astype(compute_dtype)

    # Lane-dense output: pad the last layer's columns up to a multiple of 128
    # once (tiny weight pad), slice the result back afterwards.
    D_pad = _round_up(D_out, 128)
    if D_pad != D_out:
        w3 = jnp.pad(w3, ((0, 0), (0, D_pad - D_out)))
        b3 = jnp.pad(b3, ((0, 0), (0, D_pad - D_out)))

    # Large batch tile (multiple of 8 sublanes), clamped to the batch size.
    # No explicit padding of x: Pallas handles the ragged last block
    # (padded reads, masked writes), so we avoid an extra HBM pass.
    bt = max(8, min(_round_up(batch_tile, 8), _round_up(B, 8)))
    grid = (pl.cdiv(B, bt),)

    itemsize = jnp.dtype(x.dtype).itemsize
    flops = 2 * B * (V * 128 + 128 * 256 + 256 * D_pad)
    bytes_accessed = (
        itemsize * (B * V + V * 128 + 128 * 256 + 256 * D_pad)   # x + weights
        + 4 * (128 + 256 + D_pad)                                # biases (f32)
        + 4 * B * D_pad                                          # output (f32)
    )

    out = pl.pallas_call(
        _mlp_kernel,
        out_shape=jax.ShapeDtypeStruct((B, D_pad), jnp.float32),
        grid_spec=pltpu.PrefetchScalarGridSpec(
            num_scalar_prefetch=0,
            grid=grid,
            in_specs=[
                # x: tiled over batch
                pl.BlockSpec((bt, V), lambda i: (i, 0)),
                # weights / biases: full arrays, same block every grid step
                pl.BlockSpec(w1.shape, lambda i: (0, 0)),
                pl.BlockSpec(b1.shape, lambda i: (0, 0)),
                pl.BlockSpec(w2.shape, lambda i: (0, 0)),
                pl.BlockSpec(b2.shape, lambda i: (0, 0)),
                pl.BlockSpec(w3.shape, lambda i: (0, 0)),
                pl.BlockSpec(b3.shape, lambda i: (0, 0)),
            ],
            out_specs=pl.BlockSpec((bt, D_pad), lambda i: (i, 0)),
        ),
        compiler_params=pltpu.CompilerParams(
            dimension_semantics=("parallel",),
        ),
        cost_estimate=pl.CostEstimate(
            flops=flops, transcendentals=0, bytes_accessed=bytes_accessed
        ),
    )(x, w1, b1, w2, b2, w3, b3)

    if D_pad != D_out:
        out = out[:, :D_out]
    return out


def init_params(key, vector_size, output_dim):
    """Deterministic init matching PyTorch nn.Linear shapes (weights stored transposed)."""
    dims = [(vector_size, 128), (128, 256), (256, output_dim)]
    params = {}
    for idx, (d_in, d_out) in enumerate(dims, start=1):
        key, kw, kb = jax.random.split(key, 3)
        bound = 1.0 / jnp.sqrt(jnp.float32(d_in))
        # PyTorch Linear weight is (out, in); we store (in, out) = W^T.
        params[f"w{idx}"] = jax.random.uniform(
            kw, (d_in, d_out), jnp.float32, -bound, bound
        )
        params[f"b{idx}"] = jax.random.uniform(
            kb, (1, d_out), jnp.float32, -bound, bound
        )
    return params


def reference_forward(x, params):
    h = jnp.maximum(x @ params["w1"] + params["b1"], 0.0)
    h = jnp.maximum(h @ params["w2"] + params["b2"], 0.0)
    return h @ params["w3"] + params["b3"]


if __name__ == "__main__":
    key = jax.random.PRNGKey(0)
    vector_size = 32
    output_dim = 64

    k_params, k_x1, k_x2 = jax.random.split(key, 3)
    params = init_params(k_params, vector_size, output_dim)

    # Small batch: single block covers it exactly.
    x1 = jax.random.normal(k_x1, (8, vector_size), jnp.float32)
    out1 = jax.block_until_ready(description_feed_forward(x1, params))
    ref1 = reference_forward(x1, params)
    assert out1.shape == (8, output_dim), out1.shape
    assert jnp.allclose(out1, ref1, atol=1e-5, rtol=1e-5), float(
        jnp.max(jnp.abs(out1 - ref1))
    )

    # Larger, non-tile-multiple batch to exercise multi-step grid + ragged last block.
    x2 = jax.random.normal(k_x2, (200, vector_size), jnp.float32)
    out2 = jax.block_until_ready(
        description_feed_forward(x2, params, batch_tile=64)
    )
    ref2 = reference_forward(x2, params)
    assert out2.shape == (200, output_dim), out2.shape
    assert jnp.allclose(out2, ref2, atol=1e-5, rtol=1e-5), float(
        jnp.max(jnp.abs(out2 - ref2))
    )

    print("KERNEL_OK")
</pallas_src>

<mosaic_0001>
module attributes {stable_mosaic.version = 11 : i64} {
  func.func @_mlp_kernel(%arg0: i32, %arg1: memref<8x32xf32, #tpu.memory_space<vmem>>, %arg2: memref<32x128xf32, #tpu.memory_space<vmem>>, %arg3: memref<1x128xf32, #tpu.memory_space<vmem>>, %arg4: memref<128x256xf32, #tpu.memory_space<vmem>>, %arg5: memref<1x256xf32, #tpu.memory_space<vmem>>, %arg6: memref<256x128xf32, #tpu.memory_space<vmem>>, %arg7: memref<1x128xf32, #tpu.memory_space<vmem>>, %arg8: memref<8x128xf32, #tpu.memory_space<vmem>>) attributes {dimension_semantics = [#tpu.dimension_semantics<parallel>], iteration_bounds = array<i64: 1>, scalar_prefetch = 0 : i64, scratch_operands = 0 : i64, tpu.core_type = #tpu.core_type<tc>, window_params = [{transform_indices = @transform_0, window_bounds = array<i64: 8, 32>}, {pipeline_mode = #tpu.pipeline_mode<synchronous>, transform_indices = @transform_1, window_bounds = array<i64: 32, 128>}, {pipeline_mode = #tpu.pipeline_mode<synchronous>, transform_indices = @transform_2, window_bounds = array<i64: 1, 128>}, {pipeline_mode = #tpu.pipeline_mode<synchronous>, transform_indices = @transform_3, window_bounds = array<i64: 128, 256>}, {pipeline_mode = #tpu.pipeline_mode<synchronous>, transform_indices = @transform_4, window_bounds = array<i64: 1, 256>}, {pipeline_mode = #tpu.pipeline_mode<synchronous>, transform_indices = @transform_5, window_bounds = array<i64: 256, 128>}, {pipeline_mode = #tpu.pipeline_mode<synchronous>, transform_indices = @transform_6, window_bounds = array<i64: 1, 128>}, {transform_indices = @transform_7, window_bounds = array<i64: 8, 128>}]} {
    %c0 = arith.constant 0 : index
    %c0_0 = arith.constant 0 : index
    %0 = vector.load %arg1[%c0, %c0_0] : memref<8x32xf32, #tpu.memory_space<vmem>>, vector<8x32xf32>
    %c0_1 = arith.constant 0 : index
    %c0_2 = arith.constant 0 : index
    %1 = vector.load %arg2[%c0_1, %c0_2] : memref<32x128xf32, #tpu.memory_space<vmem>>, vector<32x128xf32>
    %cst = arith.constant dense<0.000000e+00> : vector<8x128xf32>
    %2 = tpu.matmul %0, %1, %cst {dimension_numbers = #tpu.dot_dimension_numbers<[1], [0], [0], [1], [0, 0, 1, 1], [], []>} : vector<8x32xf32>, vector<32x128xf32>, vector<8x128xf32> -> vector<8x128xf32>
    %c0_3 = arith.constant 0 : index
    %c0_4 = arith.constant 0 : index
    %3 = vector.load %arg3[%c0_3, %c0_4] : memref<1x128xf32, #tpu.memory_space<vmem>>, vector<1x128xf32>
    %4 = vector.broadcast %3 : vector<1x128xf32> to vector<8x128xf32>
    %5 = arith.addf %2, %4 : vector<8x128xf32>
    %cst_5 = arith.constant 0.000000e+00 : f32
    %6 = vector.broadcast %cst_5 : f32 to vector<8x128xf32>
    %7 = arith.maximumf %5, %6 : vector<8x128xf32>
    %c0_6 = arith.constant 0 : index
    %c0_7 = arith.constant 0 : index
    %8 = vector.load %arg4[%c0_6, %c0_7] : memref<128x256xf32, #tpu.memory_space<vmem>>, vector<128x256xf32>
    %cst_8 = arith.constant dense<0.000000e+00> : vector<8x256xf32>
    %9 = tpu.matmul %7, %8, %cst_8 {dimension_numbers = #tpu.dot_dimension_numbers<[1], [0], [0], [1], [0, 0, 1, 1], [], []>} : vector<8x128xf32>, vector<128x256xf32>, vector<8x256xf32> -> vector<8x256xf32>
    %c0_9 = arith.constant 0 : index
    %c0_10 = arith.constant 0 : index
    %10 = vector.load %arg5[%c0_9, %c0_10] : memref<1x256xf32, #tpu.memory_space<vmem>>, vector<1x256xf32>
    %11 = vector.broadcast %10 : vector<1x256xf32> to vector<8x256xf32>
    %12 = arith.addf %9, %11 : vector<8x256xf32>
    %cst_11 = arith.constant 0.000000e+00 : f32
    %13 = vector.broadcast %cst_11 : f32 to vector<8x256xf32>
    %14 = arith.maximumf %12, %13 : vector<8x256xf32>
    %c0_12 = arith.constant 0 : index
    %c0_13 = arith.constant 0 : index
    %15 = vector.load %arg6[%c0_12, %c0_13] : memref<256x128xf32, #tpu.memory_space<vmem>>, vector<256x128xf32>
    %cst_14 = arith.constant dense<0.000000e+00> : vector<8x128xf32>
    %16 = tpu.matmul %14, %15, %cst_14 {dimension_numbers = #tpu.dot_dimension_numbers<[1], [0], [0], [1], [0, 0, 1, 1], [], []>} : vector<8x256xf32>, vector<256x128xf32>, vector<8x128xf32> -> vector<8x128xf32>
    %c0_15 = arith.constant 0 : index
    %c0_16 = arith.constant 0 : index
    %17 = vector.load %arg7[%c0_15, %c0_16] : memref<1x128xf32, #tpu.memory_space<vmem>>, vector<1x128xf32>
    %18 = vector.broadcast %17 : vector<1x128xf32> to vector<8x128xf32>
    %19 = arith.addf %16, %18 : vector<8x128xf32>
    %c0_17 = arith.constant 0 : index
    %c0_18 = arith.constant 0 : index
    %20 = vector.load %arg8[%c0_17, %c0_18] : memref<8x128xf32, #tpu.memory_space<vmem>>, vector<8x128xf32>
    tpu.vector_store %arg8[%c0_17, %c0_18], %19 {strides = array<i32>} : memref<8x128xf32, #tpu.memory_space<vmem>>, vector<8x128xf32>,
    return
  }
  func.func @transform_0(%arg0: i32) -> (i32, i32) {
    %c0_i32 = arith.constant 0 : i32
    %c0_i32_0 = arith.constant 0 : i32
    return %arg0, %c0_i32 : i32, i32
  }
  func.func @transform_1(%arg0: i32) -> (i32, i32) {
    %c0_i32 = arith.constant 0 : i32
    %c0_i32_0 = arith.constant 0 : i32
    %c0_i32_1 = arith.constant 0 : i32
    return %c0_i32, %c0_i32_0 : i32, i32
  }
  func.func @transform_2(%arg0: i32) -> (i32, i32) {
    %c0_i32 = arith.constant 0 : i32
    %c0_i32_0 = arith.constant 0 : i32
    %c0_i32_1 = arith.constant 0 : i32
    return %c0_i32, %c0_i32_0 : i32, i32
  }
  func.func @transform_3(%arg0: i32) -> (i32, i32) {
    %c0_i32 = arith.constant 0 : i32
    %c0_i32_0 = arith.constant 0 : i32
    %c0_i32_1 = arith.constant 0 : i32
    return %c0_i32, %c0_i32_0 : i32, i32
  }
  func.func @transform_4(%arg0: i32) -> (i32, i32) {
    %c0_i32 = arith.constant 0 : i32
    %c0_i32_0 = arith.constant 0 : i32
    %c0_i32_1 = arith.constant 0 : i32
    return %c0_i32, %c0_i32_0 : i32, i32
  }
  func.func @transform_5(%arg0: i32) -> (i32, i32) {
    %c0_i32 = arith.constant 0 : i32
    %c0_i32_0 = arith.constant 0 : i32
    %c0_i32_1 = arith.constant 0 : i32
    return %c0_i32, %c0_i32_0 : i32, i32
  }
  func.func @transform_6(%arg0: i32) -> (i32, i32) {
    %c0_i32 = arith.constant 0 : i32
    %c0_i32_0 = arith.constant 0 : i32
    %c0_i32_1 = arith.constant 0 : i32
    return %c0_i32, %c0_i32_0 : i32, i32
  }
  func.func @transform_7(%arg0: i32) -> (i32, i32) {
    %c0_i32 = arith.constant 0 : i32
    %c0_i32_0 = arith.constant 0 : i32
    return %arg0, %c0_i32 : i32, i32
  }
}

</mosaic_0001>

<llo_original>
// kernel: description_feed_forward.1
$region0: #{description_feed_forward.1}
  #allocation0 [shape = 'u32[]', space=smem, size = 0x4, offset = 0x4, fixed_abs, tag = 'smem constant byte address 0x4 - core index']
  #allocation1 [shape = 'u32[144,128]{1,0:T(1,128)}', space=vmem, size = 0x12000, scoped, tag = 'internal scratch']
  %s0 = inlined_call_operand.vmem [shape: f32[8,32], index: 0, kind: input, shape index: {}]
  %s1 = inlined_call_operand.vmem [shape: f32[32,128], index: 1, kind: input, shape index: {}]
  %s2 = inlined_call_operand.vmem [shape: f32[1,128], index: 2, kind: input, shape index: {}]
  %s3 = inlined_call_operand.vmem [shape: f32[128,256], index: 3, kind: input, shape index: {}]
  %s4 = inlined_call_operand.vmem [shape: f32[1,256], index: 4, kind: input, shape index: {}]
  %s5 = inlined_call_operand.vmem [shape: f32[256,128], index: 5, kind: input, shape index: {}]
  %s6 = inlined_call_operand.vmem [shape: f32[1,128], index: 6, kind: input, shape index: {}]
  %s7 = inlined_call_operand.hbm [shape: f32[8,128], index: 7, kind: output, shape index: {}]
  %s8 = sld [smem:[#allocation0]]
  $region38: #{description_feed_forward.1} parent=0
    _
  %s10 = ssub.s32 1, %s8
  %s11 = scalar_select 0, %s10, %s8
  $region1: #{description_feed_forward.1} parent=0
    #allocation2 [shape = 'u8[4096]{0}', space=vmem, size = 0x1000, scoped, tag = 'output window, operand 0, single buffered']
    #allocation3 [shape = 's32[1]{0}', space=sflag, size = 0x4, scoped, tag = 'scoped memory for description_feed_forward.1']
    %12 = vsyncpa [#allocation3], 0
    // Predicated region
    $region2: #{description_feed_forward.1} parent=1 // pred_check
      _
    $region3: #{description_feed_forward.1} parent=1 // pred_check_branch
      %14 = sbr.rel (0) target = $region5
    $region4: #{description_feed_forward.1} parent=1 // pred_region
      _
    $region5: #{description_feed_forward.1} parent=1 // pred_fallthru
      _
    // Predicated region
    $region6: #{description_feed_forward.1} parent=1 // pred_check
      _
    $region7: #{description_feed_forward.1} parent=1 // pred_check_branch
      %16 = sbr.rel (0) target = $region9
    $region8: #{description_feed_forward.1} parent=1 // pred_region
      _
    $region9: #{description_feed_forward.1} parent=1 // pred_fallthru
      _
    // Predicated region
    $region10: #{description_feed_forward.1} parent=1 // pred_check
      _
    $region11: #{description_feed_forward.1} parent=1 // pred_check_branch
      %18 = sbr.rel (0) target = $region13
    $region12: #{description_feed_forward.1} parent=1 // pred_region
      _
    $region13: #{description_feed_forward.1} parent=1 // pred_fallthru
      _
    // Predicated region
    $region14: #{description_feed_forward.1} parent=1 // pred_check
      _
    $region15: #{description_feed_forward.1} parent=1 // pred_check_branch
      %20 = sbr.rel (0) target = $region17
    $region16: #{description_feed_forward.1} parent=1 // pred_region
      _
    $region17: #{description_feed_forward.1} parent=1 // pred_fallthru
      _
    // Predicated region
    $region18: #{description_feed_forward.1} parent=1 // pred_check
      _
    $region19: #{description_feed_forward.1} parent=1 // pred_check_branch
      %22 = sbr.rel (0) target = $region21
    $region20: #{description_feed_forward.1} parent=1 // pred_region
      _
    $region21: #{description_feed_forward.1} parent=1 // pred_fallthru
      _
    // Predicated region
    $region22: #{description_feed_forward.1} parent=1 // pred_check
      _
    $region23: #{description_feed_forward.1} parent=1 // pred_check_branch
      %24 = sbr.rel (0) target = $region25
    $region24: #{description_feed_forward.1} parent=1 // pred_region
      _
    $region25: #{description_feed_forward.1} parent=1 // pred_fallthru
      _
    // Predicated region
    $region26: #{description_feed_forward.1} parent=1 // pred_check
      _
    $region27: #{description_feed_forward.1} parent=1 // pred_check_branch
      %26 = sbr.rel (0) target = $region29
    $region28: #{description_feed_forward.1} parent=1 // pred_region
      _
    $region29: #{description_feed_forward.1} parent=1 // pred_fallthru
      _
    %v27 = vld [vmem:[%s0] sm:$0xff]
    %v28 = vld [vmem:[%s1] sm:$0xff]
    %v29 = vld [vmem:[%s1 + $0x8] sm:$0xff]
    %v30 = vld [vmem:[%s1 + $0x10] sm:$0xff]
    %v31 = vld [vmem:[%s1 + $0x18] sm:$0xff]
    %v32 = vld [vmem:[%s2] sm:$0x1]
    %v34 = vlaneseq
    %v35 = vshrl.u32 %v34, 7
    %v36 = vsub.s32 0, %v35
    %v37 = vrot.slane %v32, %v36
    %vm39 = vcmask 261120
    %v41 = vsel %vm39, %v27, 0
    %43 = vmatprep.subr.mxu0 0.0
    %44 = vmatpush1.msra.mxu0 %v28
    %45 = vmatprep.subr.mxu0 0.0
    %46 = vmatpush1.msra.mxu0 %v29
    %47 = vmatprep.subr.mxu0 0.0
    %48 = vmatpush1.msra.mxu0 %v30
    %49 = vmatprep.subr.mxu0 0.0
    %50 = vmatpush1.msra.mxu0 %v31
    %51 = vmatprep.subr.mxu0 0.0
    %52 = vmatpush1.msra.mxu0 0.0
    %53 = vmatprep.subr.mxu0 0.0
    %54 = vmatpush1.msra.mxu0 0.0
    %55 = vmatprep.subr.mxu0 0.0
    %56 = vmatpush1.msra.mxu0 0.0
    %57 = vmatprep.subr.mxu0 0.0
    %58 = vmatpush1.msra.mxu0 0.0
    %59 = vmatprep.subr.mxu0 0.0
    %60 = vmatpush1.msra.mxu0 0.0
    %61 = vmatprep.subr.mxu0 0.0
    %62 = vmatpush1.msra.mxu0 0.0
    %63 = vmatprep.subr.mxu0 0.0
    %64 = vmatpush1.msra.mxu0 0.0
    %65 = vmatprep.subr.mxu0 0.0
    %66 = vmatpush1.msra.mxu0 0.0
    %67 = vmatprep.subr.mxu0 0.0
    %68 = vmatpush1.msra.mxu0 0.0
    %69 = vmatprep.subr.mxu0 0.0
    %70 = vmatpush1.msra.mxu0 0.0
    %71 = vmatprep.subr.mxu0 0.0
    %72 = vmatpush1.msra.mxu0 0.0
    %73 = vmatprep.subr.mxu0 0.0
    %74 = vmatpush1.msra.mxu0 0.0
    %75 = vmatprep.subr.mxu0 0.0
    %76 = vmatpush1.msra.mxu0 0.0
    %77 = vmatprep.subr.mxu0 0.0
    %78 = vmatpush1.msra.mxu0 0.0
    %79 = vmatprep.subr.mxu0 0.0
    %80 = vmatpush1.msra.mxu0 0.0
    %81 = vmatprep.subr.mxu0 0.0
    %82 = vmatpush1.msra.mxu0 0.0
    %83 = vmatprep.subr.mxu0 0.0
    %84 = vmatpush1.msra.mxu0 0.0
    %85 = vmatprep.subr.mxu0 0.0
    %86 = vmatpush1.msra.mxu0 0.0
    %87 = vmatprep.subr.mxu0 0.0
    %88 = vmatpush1.msra.mxu0 0.0
    %89 = vmatprep.subr.mxu0 0.0
    %90 = vmatpush1.msra.mxu0 0.0
    %91 = vmatprep.subr.mxu0 0.0
    %92 = vmatpush1.msra.mxu0 0.0
    %93 = vmatprep.subr.mxu0 0.0
    %94 = vmatpush1.msra.mxu0 0.0
    %95 = vmatprep.subr.mxu0 0.0
    %96 = vmatpush1.msra.mxu0 0.0
    %97 = vmatprep.subr.mxu0 0.0
    %98 = vmatpush1.msra.mxu0 0.0
    %99 = vmatprep.subr.mxu0 0.0
    %100 = vmatpush1.msra.mxu0 0.0
    %101 = vmatprep.subr.mxu0 0.0
    %102 = vmatpush1.msra.mxu0 0.0
    %103 = vmatprep.subr.mxu0 0.0
    %104 = vmatpush1.msra.mxu0 0.0
    %105 = vmatprep.subr.mxu0 0.0
    %106 = vmatpush1.msra.mxu0 0.0
    %107 = vmatprep.mubr.f32.mxu0 0.0
    %108 = vmatmul.mubr.f32.gmra.mrb[0].mxu0 %v41
    %v109 = vpop.f32.mrb[0].mxu0
    %v110 = vadd.f32 %v37, %v109
    %v111 = vpop.f32.mrb[0].mxu0
    %112 = vdwg.mxu0
    %v113 = vmax.f32 %v110, 0.0
    %v114 = vld [vmem:[%s3] sm:$0xff]
    %v115 = vld [vmem:[%s3 + $0x8] sm:$0xff]
    %v116 = vld [vmem:[%s3 + $0x10] sm:$0xff]
    %v117 = vld [vmem:[%s3 + $0x18] sm:$0xff]
    %v118 = vld [vmem:[%s3 + $0x20] sm:$0xff]
    %v119 = vld [vmem:[%s3 + $0x28] sm:$0xff]
    %v120 = vld [vmem:[%s3 + $0x30] sm:$0xff]
    %v121 = vld [vmem:[%s3 + $0x38] sm:$0xff]
    %v122 = vld [vmem:[%s3 + $0x40] sm:$0xff]
    %v123 = vld [vmem:[%s3 + $0x48] sm:$0xff]
    %v124 = vld [vmem:[%s3 + $0x50] sm:$0xff]
    %v125 = vld [vmem:[%s3 + $0x58] sm:$0xff]
    %v126 = vld [vmem:[%s3 + $0x60] sm:$0xff]
    %v127 = vld [vmem:[%s3 + $0x68] sm:$0xff]
    %v128 = vld [vmem:[%s3 + $0x70] sm:$0xff]
    %v129 = vld [vmem:[%s3 + $0x78] sm:$0xff]
    %v130 = vld [vmem:[%s3 + $0x80] sm:$0xff]
    %v131 = vld [vmem:[%s3 + $0x88] sm:$0xff]
    %v132 = vld [vmem:[%s3 + $0x90] sm:$0xff]
    %v133 = vld [vmem:[%s3 + $0x98] sm:$0xff]
    %v134 = vld [vmem:[%s3 + $0xa0] sm:$0xff]
    %v135 = vld [vmem:[%s3 + $0xa8] sm:$0xff]
    %v136 = vld [vmem:[%s3 + $0xb0] sm:$0xff]
    %v137 = vld [vmem:[%s3 + $0xb8] sm:$0xff]
    %v138 = vld [vmem:[%s3 + $0xc0] sm:$0xff]
    %v139 = vld [vmem:[%s3 + $0xc8] sm:$0xff]
    %v140 = vld [vmem:[%s3 + $0xd0] sm:$0xff]
    %v141 = vld [vmem:[%s3 + $0xd8] sm:$0xff]
    %v142 = vld [vmem:[%s3 + $0xe0] sm:$0xff]
    %v143 = vld [vmem:[%s3 + $0xe8] sm:$0xff]
    %v144 = vld [vmem:[%s3 + $0xf0] sm:$0xff]
    %v145 = vld [vmem:[%s3 + $0xf8] sm:$0xff]
    %v146 = vld [vmem:[%s4] sm:$0x3]
    %v148 = vlaneseq
    %v149 = vshrl.u32 %v148, 7
    %v150 = vsub.s32 0, %v149
    %v151 = vrot.slane %v146, %v150
    %v152 = vlaneseq
    %v153 = vshrl.u32 %v152, 7
    %v154 = vsub.s32 1, %v153
    %v155 = vrot.slane %v146, %v154
    %158 = vmatprep.subr.mxu0 %v115
    %159 = vmatpush1.msra.mxu0 %v114
    %160 = vmatprep.subr.mxu0 %v117
    %161 = vmatpush1.msra.mxu0 %v116
    %162 = vmatprep.subr.mxu0 %v119
    %163 = vmatpush1.msra.mxu0 %v118
    %164 = vmatprep.subr.mxu0 %v121
    %165 = vmatpush1.msra.mxu0 %v120
    %166 = vmatprep.subr.mxu0 %v123
    %167 = vmatpush1.msra.mxu0 %v122
    %168 = vmatprep.subr.mxu0 %v125
    %169 = vmatpush1.msra.mxu0 %v124
    %170 = vmatprep.subr.mxu0 %v127
    %171 = vmatpush1.msra.mxu0 %v126
    %172 = vmatprep.subr.mxu0 %v129
    %173 = vmatpush1.msra.mxu0 %v128
    %174 = vmatprep.subr.mxu0 %v131
    %175 = vmatpush1.msra.mxu0 %v130
    %176 = vmatprep.subr.mxu0 %v133
    %177 = vmatpush1.msra.mxu0 %v132
    %178 = vmatprep.subr.mxu0 %v135
    %179 = vmatpush1.msra.mxu0 %v134
    %180 = vmatprep.subr.mxu0 %v137
    %181 = vmatpush1.msra.mxu0 %v136
    %182 = vmatprep.subr.mxu0 %v139
    %183 = vmatpush1.msra.mxu0 %v138
    %184 = vmatprep.subr.mxu0 %v141
    %185 = vmatpush1.msra.mxu0 %v140
    %186 = vmatprep.subr.mxu0 %v143
    %187 = vmatpush1.msra.mxu0 %v142
    %188 = vmatprep.subr.mxu0 %v145
    %189 = vmatpush1.msra.mxu0 %v144
    %190 = vmatprep.subr.mxu0 0.0
    %191 = vmatpush1.msra.mxu0 0.0
    %192 = vmatprep.subr.mxu0 0.0
    %193 = vmatpush1.msra.mxu0 0.0
    %194 = vmatprep.subr.mxu0 0.0
    %195 = vmatpush1.msra.mxu0 0.0
    %196 = vmatprep.subr.mxu0 0.0
    %197 = vmatpush1.msra.mxu0 0.0
    %198 = vmatprep.subr.mxu0 0.0
    %199 = vmatpush1.msra.mxu0 0.0
    %200 = vmatprep.subr.mxu0 0.0
    %201 = vmatpush1.msra.mxu0 0.0
    %202 = vmatprep.subr.mxu0 0.0
    %203 = vmatpush1.msra.mxu0 0.0
    %204 = vmatprep.subr.mxu0 0.0
    %205 = vmatpush1.msra.mxu0 0.0
    %206 = vmatprep.subr.mxu0 0.0
    %207 = vmatpush1.msra.mxu0 0.0
    %208 = vmatprep.subr.mxu0 0.0
    %209 = vmatpush1.msra.mxu0 0.0
    %210 = vmatprep.subr.mxu0 0.0
    %211 = vmatpush1.msra.mxu0 0.0
    %212 = vmatprep.subr.mxu0 0.0
    %213 = vmatpush1.msra.mxu0 0.0
    %214 = vmatprep.subr.mxu0 0.0
    %215 = vmatpush1.msra.mxu0 0.0
    %216 = vmatprep.subr.mxu0 0.0
    %217 = vmatpush1.msra.mxu0 0.0
    %218 = vmatprep.subr.mxu0 0.0
    %219 = vmatpush1.msra.mxu0 0.0
    %220 = vmatprep.subr.mxu0 0.0
    %221 = vmatpush1.msra.mxu0 0.0
    %222 = vmatprep.mubr.f32.mxu0 0.0
    %223 = vmatmul.mubr.f32.gmra.mrb[0].mxu0 %v113
    %v224 = vpop.f32.mrb[0].mxu0
    %v225 = vadd.f32 %v151, %v224
    %v226 = vpop.f32.mrb[0].mxu0
    %v227 = vadd.f32 %v155, %v226
    %228 = vdwg.mxu0
    %v229 = vmax.f32 %v225, 0.0
    %v230 = vmax.f32 %v227, 0.0
    %v231 = vld [vmem:[%s5] sm:$0xff]
    %v232 = vld [vmem:[%s5 + $0x8] sm:$0xff]
    %v233 = vld [vmem:[%s5 + $0x10] sm:$0xff]
    %v234 = vld [vmem:[%s5 + $0x18] sm:$0xff]
    %v235 = vld [vmem:[%s5 + $0x20] sm:$0xff]
    %v236 = vld [vmem:[%s5 + $0x28] sm:$0xff]
    %v237 = vld [vmem:[%s5 + $0x30] sm:$0xff]
    %v238 = vld [vmem:[%s5 + $0x38] sm:$0xff]
    %v239 = vld [vmem:[%s5 + $0x40] sm:$0xff]
    %v240 = vld [vmem:[%s5 + $0x48] sm:$0xff]
    %v241 = vld [vmem:[%s5 + $0x50] sm:$0xff]
    %v242 = vld [vmem:[%s5 + $0x58] sm:$0xff]
    %v243 = vld [vmem:[%s5 + $0x60] sm:$0xff]
    %v244 = vld [vmem:[%s5 + $0x68] sm:$0xff]
    %v245 = vld [vmem:[%s5 + $0x70] sm:$0xff]
    %v246 = vld [vmem:[%s5 + $0x78] sm:$0xff]
    %v247 = vld [vmem:[%s5 + $0x80] sm:$0xff]
    %v248 = vld [vmem:[%s5 + $0x88] sm:$0xff]
    %v249 = vld [vmem:[%s5 + $0x90] sm:$0xff]
    %v250 = vld [vmem:[%s5 + $0x98] sm:$0xff]
    %v251 = vld [vmem:[%s5 + $0xa0] sm:$0xff]
    %v252 = vld [vmem:[%s5 + $0xa8] sm:$0xff]
    %v253 = vld [vmem:[%s5 + $0xb0] sm:$0xff]
    %v254 = vld [vmem:[%s5 + $0xb8] sm:$0xff]
    %v255 = vld [vmem:[%s5 + $0xc0] sm:$0xff]
    %v256 = vld [vmem:[%s5 + $0xc8] sm:$0xff]
    %v257 = vld [vmem:[%s5 + $0xd0] sm:$0xff]
    %v258 = vld [vmem:[%s5 + $0xd8] sm:$0xff]
    %v259 = vld [vmem:[%s5 + $0xe0] sm:$0xff]
    %v260 = vld [vmem:[%s5 + $0xe8] sm:$0xff]
    %v261 = vld [vmem:[%s5 + $0xf0] sm:$0xff]
    %v262 = vld [vmem:[%s5 + $0xf8] sm:$0xff]
    %v263 = vld [vmem:[%s6] sm:$0x1]
    %v265 = vlaneseq
    %v266 = vshrl.u32 %v265, 7
    %v267 = vsub.s32 0, %v266
    %v268 = vrot.slane %v263, %v267
    %270 = vmatprep.subr.mxu0 0.0
    %271 = vmatpush1.msra.mxu0 %v231
    %272 = vmatprep.subr.mxu0 0.0
    %273 = vmatpush1.msra.mxu0 %v232
    %274 = vmatprep.subr.mxu0 0.0
    %275 = vmatpush1.msra.mxu0 %v233
    %276 = vmatprep.subr.mxu0 0.0
    %277 = vmatpush1.msra.mxu0 %v234
    %278 = vmatprep.subr.mxu0 0.0
    %279 = vmatpush1.msra.mxu0 %v235
    %280 = vmatprep.subr.mxu0 0.0
    %281 = vmatpush1.msra.mxu0 %v236
    %282 = vmatprep.subr.mxu0 0.0
    %283 = vmatpush1.msra.mxu0 %v237
    %284 = vmatprep.subr.mxu0 0.0
    %285 = vmatpush1.msra.mxu0 %v238
    %286 = vmatprep.subr.mxu0 0.0
    %287 = vmatpush1.msra.mxu0 %v239
    %288 = vmatprep.subr.mxu0 0.0
    %289 = vmatpush1.msra.mxu0 %v240
    %290 = vmatprep.subr.mxu0 0.0
    %291 = vmatpush1.msra.mxu0 %v241
    %292 = vmatprep.subr.mxu0 0.0
    %293 = vmatpush1.msra.mxu0 %v242
    %294 = vmatprep.subr.mxu0 0.0
    %295 = vmatpush1.msra.mxu0 %v243
    %296 = vmatprep.subr.mxu0 0.0
    %297 = vmatpush1.msra.mxu0 %v244
    %298 = vmatprep.subr.mxu0 0.0
    %299 = vmatpush1.msra.mxu0 %v245
    %300 = vmatprep.subr.mxu0 0.0
    %301 = vmatpush1.msra.mxu0 %v246
    %302 = vmatprep.subr.mxu0 0.0
    %303 = vmatpush1.msra.mxu0 %v247
    %304 = vmatprep.subr.mxu0 0.0
    %305 = vmatpush1.msra.mxu0 %v248
    %306 = vmatprep.subr.mxu0 0.0
    %307 = vmatpush1.msra.mxu0 %v249
    %308 = vmatprep.subr.mxu0 0.0
    %309 = vmatpush1.msra.mxu0 %v250
    %310 = vmatprep.subr.mxu0 0.0
    %311 = vmatpush1.msra.mxu0 %v251
    %312 = vmatprep.subr.mxu0 0.0
    %313 = vmatpush1.msra.mxu0 %v252
    %314 = vmatprep.subr.mxu0 0.0
    %315 = vmatpush1.msra.mxu0 %v253
    %316 = vmatprep.subr.mxu0 0.0
    %317 = vmatpush1.msra.mxu0 %v254
    %318 = vmatprep.subr.mxu0 0.0
    %319 = vmatpush1.msra.mxu0 %v255
    %320 = vmatprep.subr.mxu0 0.0
    %321 = vmatpush1.msra.mxu0 %v256
    %322 = vmatprep.subr.mxu0 0.0
    %323 = vmatpush1.msra.mxu0 %v257
    %324 = vmatprep.subr.mxu0 0.0
    %325 = vmatpush1.msra.mxu0 %v258
    %326 = vmatprep.subr.mxu0 0.0
    %327 = vmatpush1.msra.mxu0 %v259
    %328 = vmatprep.subr.mxu0 0.0
    %329 = vmatpush1.msra.mxu0 %v260
    %330 = vmatprep.subr.mxu0 0.0
    %331 = vmatpush1.msra.mxu0 %v261
    %332 = vmatprep.subr.mxu0 0.0
    %333 = vmatpush1.msra.mxu0 %v262
    %334 = vmatprep.mubr.f32.mxu0 %v230
    %335 = vmatmul.mubr.f32.gmra.mrb[0].mxu0 %v229
    %v336 = vpop.f32.mrb[0].mxu0
    %v337 = vadd.f32 %v268, %v336
    %v338 = vpop.f32.mrb[0].mxu0
    %339 = vdwg.mxu0
    %340 = vst [vmem:[#allocation2] sm:$0xff] %v337
    // Predicated region
    $region30: #{description_feed_forward.1} parent=1 // pred_check
      _
    $region31: #{description_feed_forward.1} parent=1 // pred_check_branch
      %342 = sbr.rel (0) target = $region33
    $region32: #{description_feed_forward.1} parent=1 // pred_region
      %s344 = ssub.s32 128, 128
      %345 = vsyncadd [#allocation3], %s344
      %s347 = sshll.u32 [#allocation2], 4
      %s348 = int_to_ptr.vmem [resolvable:$true] %s347
      %350 = dma.vmem_to_hbm [thread:$0]  %s348, 128, %s7, [#allocation3]
    $region33: #{description_feed_forward.1} parent=1 // pred_fallthru
      _
    // Predicated region
    $region34: #{description_feed_forward.1} parent=1 // pred_check
      _
    $region35: #{description_feed_forward.1} parent=1 // pred_check_branch
      %352 = sbr.rel (0) target = $region37
    $region36: #{description_feed_forward.1} parent=1 // pred_region
      %353 = dma.done [#allocation3], 128
    $region37: #{description_feed_forward.1} parent=1 // pred_fallthru
      _
    %354 = vsyncpa [#allocation3], 1

</llo_original>
